<compile_context>
chip_gen: v5e
topology: v5e:2x2
jax: 0.10.0
libtpu: 0.0.40
codegen_flags: <defaults>
</compile_context>

<pallas_src>
import functools

import jax
import jax.numpy as jnp
from jax.experimental import pallas as pl
from jax.experimental.pallas import tpu as pltpu


def _linear_act_norm_kernel(x_ref, w_ref, b_ref, wa1_ref, ba1_ref, wa2_ref,
                            ba2_ref, o_ref, *, eps):
    # x_ref: (Bt, N, D_in) block; weights/biases are replicated across the grid.
    bt, n, d_in = x_ref.shape
    d_out = w_ref.shape[1]

    x = x_ref[...].astype(jnp.float32).reshape(bt * n, d_in)        # (Bt*N, D_in)

    # 1) Linear: one batched MXU pass over all Bt*N rows (weights config-invariant).
    y = jnp.dot(x, w_ref[...], preferred_element_type=jnp.float32) + b_ref[...]

    # 2) InstanceNorm1d: normalize over the node dim per (config, channel),
    #    biased variance, hoisted rsqrt (one (Bt,1,D_out) rsqrt, no N-wide divide).
    y3 = y.reshape(bt, n, d_out)
    mean = jnp.mean(y3, axis=1, keepdims=True)                       # (Bt, 1, D_out)
    c = y3 - mean
    var = jnp.mean(c * c, axis=1, keepdims=True)                     # (Bt, 1, D_out)
    z = (c * jax.lax.rsqrt(var + eps)).reshape(bt * n, d_out)        # (Bt*N, D_out)

    # 3) ChannelAttention: sigmoid(relu(z @ Wa1 + ba1) @ Wa2 + ba2) * z
    h = jnp.dot(z, wa1_ref[...], preferred_element_type=jnp.float32) + ba1_ref[...]
    h = jnp.maximum(h, 0.0)
    t = jnp.dot(h, wa2_ref[...], preferred_element_type=jnp.float32) + ba2_ref[...]
    g = 0.5 * jnp.tanh(0.5 * t) + 0.5        # sigmoid via a single EUP transcendental
    z = g * z

    # 4) Final activation (ReLU) and store.
    o_ref[...] = jnp.maximum(z, 0.0).reshape(bt, n, d_out).astype(o_ref.dtype)


def _pick_block_b(B, N, D_in, D_out, H, vmem_cap):
    """Configs per grid step, sized against per-generation VMEM."""
    # Per-config f32 footprint: double-buffered x/out blocks + ~6 live temporaries.
    per_cfg = 4 * N * (2 * (D_in + D_out) + 6 * D_out + H)
    bt = max(1, int(0.5 * vmem_cap) // max(per_cfg, 1))
    # Target ~512 rows per step: fills the MXU and amortizes the ~600-cycle
    # fixed per-step cost, without ballooning temporaries.
    bt = min(bt, max(1, 512 // max(N, 1)))
    # Keep >= 2 grid steps when B >= 2 so the "parallel" axis can still be
    # sharded across v7x's two TensorCores (near-free on 1-TC v5e/v6e).
    if B >= 2:
        bt = min(bt, B // 2)
    bt = max(1, min(bt, B))
    while B % bt != 0:   # Bt must divide B (static grid)
        bt -= 1
    return max(bt, 1)


def linear_act_norm(x, w1, b1, wa1, ba1, wa2, ba2, eps=1e-5, block_b=None):
    """Fused LinearActNorm forward.

    x:   (B, N, D_in)   configs x nodes x features
    w1:  (D_in, D_out)  linear weight (already transposed vs. torch layout)
    b1:  (1, D_out)
    wa1: (D_out, H), ba1: (1, H), wa2: (H, D_out), ba2: (1, D_out)  channel attention
    """
    B, N, D_in = x.shape
    D_out = w1.shape[1]
    H = wa1.shape[1]

    # Generation-aware VMEM capacity (v7x: 64 MiB/TC, v5e/v6e: 128 MiB).
    try:
        vmem_cap = int(pltpu.get_tpu_info().vmem_capacity_bytes)
    except Exception:
        vmem_cap = 64 * 1024 * 1024   # conservative v7x floor

    if block_b is None:
        block_b = _pick_block_b(B, N, D_in, D_out, H, vmem_cap)
    assert B % block_b == 0, "block_b must divide the number of configs"
    grid = (B // block_b,)

    # Derive the scoped-VMEM limit from the actual footprint (double-buffered
    # I/O blocks + weights + live f32 temporaries), with 2x headroom, clamped
    # to 3/4 of physical VMEM so Mosaic internal scratch still fits.
    blk_bytes = 4 * block_b * N * (D_in + D_out)                  # one x + one out block
    w_bytes = 4 * (D_in * D_out + D_out + D_out * H + H + H * D_out + D_out)
    tmp_bytes = 4 * block_b * N * (6 * D_out + H)
    est = 2 * blk_bytes + 2 * w_bytes + tmp_bytes
    vmem_limit = int(min(vmem_cap * 3 // 4, max(32 << 20, 2 * est)))

    kernel = functools.partial(_linear_act_norm_kernel, eps=eps)

    return pl.pallas_call(
        kernel,
        out_shape=jax.ShapeDtypeStruct((B, N, D_out), x.dtype),
        grid_spec=pltpu.PrefetchScalarGridSpec(
            num_scalar_prefetch=0,
            grid=grid,                                              # Bt configs / step
            in_specs=[
                pl.BlockSpec((block_b, N, D_in), lambda b: (b, 0, 0)),   # x
                pl.BlockSpec((D_in, D_out), lambda b: (0, 0)),           # W (linear)
                pl.BlockSpec((1, D_out), lambda b: (0, 0)),              # bias (linear)
                pl.BlockSpec((D_out, H), lambda b: (0, 0)),              # Wa1
                pl.BlockSpec((1, H), lambda b: (0, 0)),                  # ba1
                pl.BlockSpec((H, D_out), lambda b: (0, 0)),              # Wa2
                pl.BlockSpec((1, D_out), lambda b: (0, 0)),              # ba2
            ],
            out_specs=pl.BlockSpec((block_b, N, D_out), lambda b: (b, 0, 0)),
        ),
        compiler_params=pltpu.CompilerParams(
            dimension_semantics=("parallel",),        # shard config-steps across TCs
            vmem_limit_bytes=vmem_limit,
        ),
    )(x, w1, b1, wa1, ba1, wa2, ba2)


def _reference(x, w1, b1, wa1, ba1, wa2, ba2, eps=1e-5):
    """Pure-JAX mirror of the torch LinearActNorm forward (default config)."""
    hp = jax.lax.Precision.HIGHEST
    y = jnp.einsum("bnd,de->bne", x, w1, precision=hp) + b1
    mean = jnp.mean(y, axis=1, keepdims=True)
    var = jnp.mean((y - mean) ** 2, axis=1, keepdims=True)    # biased, as torch IN
    z = (y - mean) / jnp.sqrt(var + eps)
    h = jnp.maximum(jnp.einsum("bne,eh->bnh", z, wa1, precision=hp) + ba1, 0.0)
    g = jax.nn.sigmoid(jnp.einsum("bnh,he->bne", h, wa2, precision=hp) + ba2)
    return jnp.maximum(g * z, 0.0)


if __name__ == "__main__":
    # Small shapes consistent with the module:
    #   nb_configs=2, nb_nodes=8, input_dim=32, output_dim=64, reduction=8 -> H=8
    B, N, D_in, D_out, reduction = 2, 8, 32, 64, 8
    H = D_out // reduction

    key = jax.random.PRNGKey(0)
    k = jax.random.split(key, 6)
    x = jax.random.normal(k[0], (B, N, D_in), dtype=jnp.float32)

    # nn.Linear init from the module: xavier_normal_ weight, bias filled with 0.01.
    xavier_std = (2.0 / (D_in + D_out)) ** 0.5
    w1 = xavier_std * jax.random.normal(k[1], (D_in, D_out), dtype=jnp.float32)
    b1 = jnp.full((1, D_out), 0.01, dtype=jnp.float32)

    # ChannelAttention linears: deterministic uniform init (torch default style).
    lim1 = 1.0 / (D_out ** 0.5)
    wa1 = jax.random.uniform(k[2], (D_out, H), jnp.float32, -lim1, lim1)
    ba1 = jax.random.uniform(k[3], (1, H), jnp.float32, -lim1, lim1)
    lim2 = 1.0 / (H ** 0.5)
    wa2 = jax.random.uniform(k[4], (H, D_out), jnp.float32, -lim2, lim2)
    ba2 = jax.random.uniform(k[5], (1, D_out), jnp.float32, -lim2, lim2)

    out = linear_act_norm(x, w1, b1, wa1, ba1, wa2, ba2)
    out = jax.block_until_ready(out)

    ref = _reference(x, w1, b1, wa1, ba1, wa2, ba2)
    assert out.shape == (B, N, D_out)
    assert jnp.allclose(out, ref, atol=1e-4, rtol=1e-4), "mismatch vs reference"

    print("KERNEL_OK")
</pallas_src>

<mosaic_0001>
module attributes {stable_mosaic.version = 11 : i64} {
  func.func @_linear_act_norm_kernel(%arg0: i32, %arg1: memref<1x8x32xf32, #tpu.memory_space<vmem>>, %arg2: memref<32x64xf32, #tpu.memory_space<vmem>>, %arg3: memref<1x64xf32, #tpu.memory_space<vmem>>, %arg4: memref<64x8xf32, #tpu.memory_space<vmem>>, %arg5: memref<1x8xf32, #tpu.memory_space<vmem>>, %arg6: memref<8x64xf32, #tpu.memory_space<vmem>>, %arg7: memref<1x64xf32, #tpu.memory_space<vmem>>, %arg8: memref<1x8x64xf32, #tpu.memory_space<vmem>>) attributes {dimension_semantics = [#tpu.dimension_semantics<parallel>], iteration_bounds = array<i64: 2>, scalar_prefetch = 0 : i64, scratch_operands = 0 : i64, tpu.core_type = #tpu.core_type<tc>, window_params = [{transform_indices = @transform_0, window_bounds = array<i64: 1, 8, 32>}, {pipeline_mode = #tpu.pipeline_mode<synchronous>, transform_indices = @transform_1, window_bounds = array<i64: 32, 64>}, {pipeline_mode = #tpu.pipeline_mode<synchronous>, transform_indices = @transform_2, window_bounds = array<i64: 1, 64>}, {pipeline_mode = #tpu.pipeline_mode<synchronous>, transform_indices = @transform_3, window_bounds = array<i64: 64, 8>}, {pipeline_mode = #tpu.pipeline_mode<synchronous>, transform_indices = @transform_4, window_bounds = array<i64: 1, 8>}, {pipeline_mode = #tpu.pipeline_mode<synchronous>, transform_indices = @transform_5, window_bounds = array<i64: 8, 64>}, {pipeline_mode = #tpu.pipeline_mode<synchronous>, transform_indices = @transform_6, window_bounds = array<i64: 1, 64>}, {transform_indices = @transform_7, window_bounds = array<i64: 1, 8, 64>}]} {
    %c0 = arith.constant 0 : index
    %c0_0 = arith.constant 0 : index
    %c0_1 = arith.constant 0 : index
    %0 = vector.load %arg1[%c0, %c0_0, %c0_1] : memref<1x8x32xf32, #tpu.memory_space<vmem>>, vector<1x8x32xf32>
    %1 = vector.shape_cast %0 : vector<1x8x32xf32> to vector<8x32xf32>
    %c0_2 = arith.constant 0 : index
    %c0_3 = arith.constant 0 : index
    %2 = vector.load %arg2[%c0_2, %c0_3] : memref<32x64xf32, #tpu.memory_space<vmem>>, vector<32x64xf32>
    %cst = arith.constant dense<0.000000e+00> : vector<8x64xf32>
    %3 = tpu.matmul %1, %2, %cst {dimension_numbers = #tpu.dot_dimension_numbers<[1], [0], [0], [1], [0, 0, 1, 1], [], []>} : vector<8x32xf32>, vector<32x64xf32>, vector<8x64xf32> -> vector<8x64xf32>
    %c0_4 = arith.constant 0 : index
    %c0_5 = arith.constant 0 : index
    %4 = vector.load %arg3[%c0_4, %c0_5] : memref<1x64xf32, #tpu.memory_space<vmem>>, vector<1x64xf32>
    %5 = vector.broadcast %4 : vector<1x64xf32> to vector<8x64xf32>
    %6 = arith.addf %3, %5 : vector<8x64xf32>
    %7 = vector.shape_cast %6 : vector<8x64xf32> to vector<1x8x64xf32>
    %cst_6 = arith.constant dense<0.000000e+00> : vector<1x64xf32>
    %8 = vector.multi_reduction <add>, %7, %cst_6 [1] : vector<1x8x64xf32> to vector<1x64xf32>
    %9 = vector.shape_cast %8 : vector<1x64xf32> to vector<1x1x64xf32>
    %cst_7 = arith.constant 8.000000e+00 : f32
    %10 = vector.broadcast %cst_7 : f32 to vector<1x1x64xf32>
    %11 = arith.divf %9, %10 : vector<1x1x64xf32>
    %12 = vector.broadcast %11 : vector<1x1x64xf32> to vector<1x8x64xf32>
    %13 = arith.subf %7, %12 : vector<1x8x64xf32>
    %14 = arith.mulf %13, %13 : vector<1x8x64xf32>
    %cst_8 = arith.constant dense<0.000000e+00> : vector<1x64xf32>
    %15 = vector.multi_reduction <add>, %14, %cst_8 [1] : vector<1x8x64xf32> to vector<1x64xf32>
    %16 = vector.shape_cast %15 : vector<1x64xf32> to vector<1x1x64xf32>
    %cst_9 = arith.constant 8.000000e+00 : f32
    %17 = vector.broadcast %cst_9 : f32 to vector<1x1x64xf32>
    %18 = arith.divf %16, %17 : vector<1x1x64xf32>
    %cst_10 = arith.constant 9.99999974E-6 : f32
    %19 = vector.broadcast %cst_10 : f32 to vector<1x1x64xf32>
    %20 = arith.addf %18, %19 : vector<1x1x64xf32>
    %21 = math.rsqrt %20 : vector<1x1x64xf32>
    %22 = vector.broadcast %21 : vector<1x1x64xf32> to vector<1x8x64xf32>
    %23 = arith.mulf %13, %22 : vector<1x8x64xf32>
    %24 = vector.shape_cast %23 : vector<1x8x64xf32> to vector<8x64xf32>
    %c0_11 = arith.constant 0 : index
    %c0_12 = arith.constant 0 : index
    %25 = vector.load %arg4[%c0_11, %c0_12] : memref<64x8xf32, #tpu.memory_space<vmem>>, vector<64x8xf32>
    %cst_13 = arith.constant dense<0.000000e+00> : vector<8x8xf32>
    %26 = tpu.matmul %24, %25, %cst_13 {dimension_numbers = #tpu.dot_dimension_numbers<[1], [0], [0], [1], [0, 0, 1, 1], [], []>} : vector<8x64xf32>, vector<64x8xf32>, vector<8x8xf32> -> vector<8x8xf32>
    %c0_14 = arith.constant 0 : index
    %c0_15 = arith.constant 0 : index
    %27 = vector.load %arg5[%c0_14, %c0_15] : memref<1x8xf32, #tpu.memory_space<vmem>>, vector<1x8xf32>
    %28 = vector.broadcast %27 : vector<1x8xf32> to vector<8x8xf32>
    %29 = arith.addf %26, %28 : vector<8x8xf32>
    %cst_16 = arith.constant 0.000000e+00 : f32
    %30 = vector.broadcast %cst_16 : f32 to vector<8x8xf32>
    %31 = arith.maximumf %29, %30 : vector<8x8xf32>
    %c0_17 = arith.constant 0 : index
    %c0_18 = arith.constant 0 : index
    %32 = vector.load %arg6[%c0_17, %c0_18] : memref<8x64xf32, #tpu.memory_space<vmem>>, vector<8x64xf32>
    %cst_19 = arith.constant dense<0.000000e+00> : vector<8x64xf32>
    %33 = tpu.matmul %31, %32, %cst_19 {dimension_numbers = #tpu.dot_dimension_numbers<[1], [0], [0], [1], [0, 0, 1, 1], [], []>} : vector<8x8xf32>, vector<8x64xf32>, vector<8x64xf32> -> vector<8x64xf32>
    %c0_20 = arith.constant 0 : index
    %c0_21 = arith.constant 0 : index
    %34 = vector.load %arg7[%c0_20, %c0_21] : memref<1x64xf32, #tpu.memory_space<vmem>>, vector<1x64xf32>
    %35 = vector.broadcast %34 : vector<1x64xf32> to vector<8x64xf32>
    %36 = arith.addf %33, %35 : vector<8x64xf32>
    %cst_22 = arith.constant 5.000000e-01 : f32
    %37 = vector.broadcast %cst_22 : f32 to vector<8x64xf32>
    %38 = arith.mulf %37, %36 : vector<8x64xf32>
    %39 = math.tanh %38 : vector<8x64xf32>
    %cst_23 = arith.constant 5.000000e-01 : f32
    %40 = vector.broadcast %cst_23 : f32 to vector<8x64xf32>
    %41 = arith.mulf %40, %39 : vector<8x64xf32>
    %cst_24 = arith.constant 5.000000e-01 : f32
    %42 = vector.broadcast %cst_24 : f32 to vector<8x64xf32>
    %43 = arith.addf %41, %42 : vector<8x64xf32>
    %44 = arith.mulf %43, %24 : vector<8x64xf32>
    %cst_25 = arith.constant 0.000000e+00 : f32
    %45 = vector.broadcast %cst_25 : f32 to vector<8x64xf32>
    %46 = arith.maximumf %44, %45 : vector<8x64xf32>
    %47 = vector.shape_cast %46 : vector<8x64xf32> to vector<1x8x64xf32>
    %c0_26 = arith.constant 0 : index
    %c0_27 = arith.constant 0 : index
    %c0_28 = arith.constant 0 : index
    %48 = vector.load %arg8[%c0_26, %c0_27, %c0_28] : memref<1x8x64xf32, #tpu.memory_space<vmem>>, vector<1x8x64xf32>
    tpu.vector_store %arg8[%c0_26, %c0_27, %c0_28], %47 {strides = array<i32>} : memref<1x8x64xf32, #tpu.memory_space<vmem>>, vector<1x8x64xf32>,
    return
  }
  func.func @transform_0(%arg0: i32) -> (i32, i32, i32) {
    %c0_i32 = arith.constant 0 : i32
    %c0_i32_0 = arith.constant 0 : i32
    %c0_i32_1 = arith.constant 0 : i32
    return %arg0, %c0_i32, %c0_i32_0 : i32, i32, i32
  }
  func.func @transform_1(%arg0: i32) -> (i32, i32) {
    %c0_i32 = arith.constant 0 : i32
    %c0_i32_0 = arith.constant 0 : i32
    %c0_i32_1 = arith.constant 0 : i32
    return %c0_i32, %c0_i32_0 : i32, i32
  }
  func.func @transform_2(%arg0: i32) -> (i32, i32) {
    %c0_i32 = arith.constant 0 : i32
    %c0_i32_0 = arith.constant 0 : i32
    %c0_i32_1 = arith.constant 0 : i32
    return %c0_i32, %c0_i32_0 : i32, i32
  }
  func.func @transform_3(%arg0: i32) -> (i32, i32) {
    %c0_i32 = arith.constant 0 : i32
    %c0_i32_0 = arith.constant 0 : i32
    %c0_i32_1 = arith.constant 0 : i32
    return %c0_i32, %c0_i32_0 : i32, i32
  }
  func.func @transform_4(%arg0: i32) -> (i32, i32) {
    %c0_i32 = arith.constant 0 : i32
    %c0_i32_0 = arith.constant 0 : i32
    %c0_i32_1 = arith.constant 0 : i32
    return %c0_i32, %c0_i32_0 : i32, i32
  }
  func.func @transform_5(%arg0: i32) -> (i32, i32) {
    %c0_i32 = arith.constant 0 : i32
    %c0_i32_0 = arith.constant 0 : i32
    %c0_i32_1 = arith.constant 0 : i32
    return %c0_i32, %c0_i32_0 : i32, i32
  }
  func.func @transform_6(%arg0: i32) -> (i32, i32) {
    %c0_i32 = arith.constant 0 : i32
    %c0_i32_0 = arith.constant 0 : i32
    %c0_i32_1 = arith.constant 0 : i32
    return %c0_i32, %c0_i32_0 : i32, i32
  }
  func.func @transform_7(%arg0: i32) -> (i32, i32, i32) {
    %c0_i32 = arith.constant 0 : i32
    %c0_i32_0 = arith.constant 0 : i32
    %c0_i32_1 = arith.constant 0 : i32
    return %arg0, %c0_i32, %c0_i32_0 : i32, i32, i32
  }
}

</mosaic_0001>

<llo_original>
// kernel: tpu_custom_call.1
$region0: #{tpu_custom_call.1}
  #allocation0 [shape = 'u32[]', space=smem, size = 0x4, offset = 0x4, fixed_abs, tag = 'smem constant byte address 0x4 - core index']
  #allocation1 [shape = 'u32[72,128]{1,0:T(1,128)}', space=vmem, size = 0x9000, scoped, tag = 'internal scratch']
  %s0 = inlined_call_operand.vmem [shape: f32[2,8,32], index: 0, kind: input, shape index: {}]
  %s1 = inlined_call_operand.vmem [shape: f32[32,64], index: 1, kind: input, shape index: {}]
  %s2 = inlined_call_operand.vmem [shape: f32[1,64], index: 2, kind: input, shape index: {}]
  %s3 = inlined_call_operand.vmem [shape: f32[64,8], index: 3, kind: input, shape index: {}]
  %s4 = inlined_call_operand.vmem [shape: f32[1,8], index: 4, kind: input, shape index: {}]
  %s5 = inlined_call_operand.vmem [shape: f32[8,64], index: 5, kind: input, shape index: {}]
  %s6 = inlined_call_operand.vmem [shape: f32[1,64], index: 6, kind: input, shape index: {}]
  %s7 = inlined_call_operand.hbm [shape: f32[2,8,64], index: 7, kind: output, shape index: {}]
  %s8 = sld [smem:[#allocation0]]
  $region61: #{tpu_custom_call.1} parent=0
    _
  %s10 = ssub.s32 1, %s8
  %s11 = scalar_select 0, %s10, %s8
  $region1: #{tpu_custom_call.1} parent=0
    #allocation2 [shape = 'u8[8192]{0}', space=vmem, size = 0x2000, scoped, tag = 'output window, operand 0']
    #allocation3 [shape = 's32[2]{0}', space=sflag, size = 0x8, scoped, tag = 'scoped memory for tpu_custom_call.1']
    %12 = vsyncpa [#allocation3], 0
    %s13 = scalar_lea.sflag [#allocation3], 1
    %14 = vsyncpa %s13, 0
    loop: start=0, step=1, limit=4
    $region2: #{tpu_custom_call.1} parent=1 // loop_pre_header
      _
    $region3: #{tpu_custom_call.1} parent=1 // loop_header
      %s16 = sphi 0, %s20
      %p17 = scmp.ge.s32.totalorder %s16, 4
      %s26 = sphi 0, %s28
      %s29 = sphi 0, %s26
      %s30 = sphi 0, %s29
      %s46 = sphi 0, %s30
      %s50 = sphi 0, %s50
      %s52 = sphi 0, %s50
      %s53 = sphi 0, %s52
      %s67 = sphi 0, %s53
      %s71 = sphi 0, %s71
      %s73 = sphi 0, %s71
      %s74 = sphi 0, %s73
      %s88 = sphi 0, %s74
      %s92 = sphi 0, %s92
      %s94 = sphi 0, %s92
      %s95 = sphi 0, %s94
      %s109 = sphi 0, %s95
      %s113 = sphi 0, %s113
      %s115 = sphi 0, %s113
      %s116 = sphi 0, %s115
      %s130 = sphi 0, %s116
      %s134 = sphi 0, %s134
      %s136 = sphi 0, %s134
      %s137 = sphi 0, %s136
      %s151 = sphi 0, %s137
      %s155 = sphi 0, %s155
      %s157 = sphi 0, %s155
      %s158 = sphi 0, %s157
      %s172 = sphi 0, %s158
      %s178 = sphi 0, %s180
      %s181 = sphi 0, %s178
      %s182 = sphi 0, %s181
      %s198 = sphi 0, %s182
    $region4: #{tpu_custom_call.1} parent=1 // loop_header_branch
      %19 = sbr.rel (%p17) target = $region8
    $region5: #{tpu_custom_call.1} parent=1 // loop_body
      %s21 = ssub.s32 %s16, 1
      %s22 = ssub.s32 %s16, 2
      %s23 = sadd.s32 %s16, 1
      %s24 = ssub.s32 %s16, %s23
      %p25 = scmp.eq.s32.totalorder %s24, 0
      %s27 = sadd.s32 %s26, 1
      %s28 = scalar_select %p25, %s26, %s27
      %p31 = pneg %p25
      %p32 = scmp.eq.s32.totalorder %s16, 1
      %p33 = por %p31, %p32
      %p34 = scmp.ne.s32.totalorder %s26, %s29
      %p35 = scmp.eq.s32.totalorder %s16, 0
      %p36 = por %p34, %p35
      %p37 = scmp.ne.s32.totalorder %s26, %s29
      %p38 = scmp.eq.s32.totalorder %s21, 1
      %p39 = por %p37, %p38
      %p40 = scmp.ne.s32.totalorder %s29, %s30
      %p41 = scmp.eq.s32.totalorder %s21, 0
      %p42 = por %p40, %p41
      %p43 = scmp.ne.s32.totalorder %s29, %s30
      %p44 = scmp.eq.s32.totalorder %s22, 1
      %p45 = por %p43, %p44
      %p47 = scmp.ne.s32.totalorder %s30, %s46
      %p48 = scmp.eq.s32.totalorder %s22, 0
      %p49 = por %p47, %p48
      %s51 = sadd.s32 %s50, 1
      %p54 = scmp.eq.s32.totalorder %s16, 1
      %p55 = scmp.ne.s32.totalorder %s50, %s52
      %p56 = scmp.eq.s32.totalorder %s16, 0
      %p57 = por %p55, %p56
      %p58 = scmp.ne.s32.totalorder %s50, %s52
      %p59 = scmp.eq.s32.totalorder %s21, 1
      %p60 = por %p58, %p59
      %p61 = scmp.ne.s32.totalorder %s52, %s53
      %p62 = scmp.eq.s32.totalorder %s21, 0
      %p63 = por %p61, %p62
      %p64 = scmp.ne.s32.totalorder %s52, %s53
      %p65 = scmp.eq.s32.totalorder %s22, 1
      %p66 = por %p64, %p65
      %p68 = scmp.ne.s32.totalorder %s53, %s67
      %p69 = scmp.eq.s32.totalorder %s22, 0
      %p70 = por %p68, %p69
      %s72 = sadd.s32 %s71, 1
      %p75 = scmp.eq.s32.totalorder %s16, 1
      %p76 = scmp.ne.s32.totalorder %s71, %s73
      %p77 = scmp.eq.s32.totalorder %s16, 0
      %p78 = por %p76, %p77
      %p79 = scmp.ne.s32.totalorder %s71, %s73
      %p80 = scmp.eq.s32.totalorder %s21, 1
      %p81 = por %p79, %p80
      %p82 = scmp.ne.s32.totalorder %s73, %s74
      %p83 = scmp.eq.s32.totalorder %s21, 0
      %p84 = por %p82, %p83
      %p85 = scmp.ne.s32.totalorder %s73, %s74
      %p86 = scmp.eq.s32.totalorder %s22, 1
      %p87 = por %p85, %p86
      %p89 = scmp.ne.s32.totalorder %s74, %s88
      %p90 = scmp.eq.s32.totalorder %s22, 0
      %p91 = por %p89, %p90
      %s93 = sadd.s32 %s92, 1
      %p96 = scmp.eq.s32.totalorder %s16, 1
      %p97 = scmp.ne.s32.totalorder %s92, %s94
      %p98 = scmp.eq.s32.totalorder %s16, 0
      %p99 = por %p97, %p98
      %p100 = scmp.ne.s32.totalorder %s92, %s94
      %p101 = scmp.eq.s32.totalorder %s21, 1
      %p102 = por %p100, %p101
      %p103 = scmp.ne.s32.totalorder %s94, %s95
      %p104 = scmp.eq.s32.totalorder %s21, 0
      %p105 = por %p103, %p104
      %p106 = scmp.ne.s32.totalorder %s94, %s95
      %p107 = scmp.eq.s32.totalorder %s22, 1
      %p108 = por %p106, %p107
      %p110 = scmp.ne.s32.totalorder %s95, %s109
      %p111 = scmp.eq.s32.totalorder %s22, 0
      %p112 = por %p110, %p111
      %s114 = sadd.s32 %s113, 1
      %p117 = scmp.eq.s32.totalorder %s16, 1
      %p118 = scmp.ne.s32.totalorder %s113, %s115
      %p119 = scmp.eq.s32.totalorder %s16, 0
      %p120 = por %p118, %p119
      %p121 = scmp.ne.s32.totalorder %s113, %s115
      %p122 = scmp.eq.s32.totalorder %s21, 1
      %p123 = por %p121, %p122
      %p124 = scmp.ne.s32.totalorder %s115, %s116
      %p125 = scmp.eq.s32.totalorder %s21, 0
      %p126 = por %p124, %p125
      %p127 = scmp.ne.s32.totalorder %s115, %s116
      %p128 = scmp.eq.s32.totalorder %s22, 1
      %p129 = por %p127, %p128
      %p131 = scmp.ne.s32.totalorder %s116, %s130
      %p132 = scmp.eq.s32.totalorder %s22, 0
      %p133 = por %p131, %p132
      %s135 = sadd.s32 %s134, 1
      %p138 = scmp.eq.s32.totalorder %s16, 1
      %p139 = scmp.ne.s32.totalorder %s134, %s136
      %p140 = scmp.eq.s32.totalorder %s16, 0
      %p141 = por %p139, %p140
      %p142 = scmp.ne.s32.totalorder %s134, %s136
      %p143 = scmp.eq.s32.totalorder %s21, 1
      %p144 = por %p142, %p143
      %p145 = scmp.ne.s32.totalorder %s136, %s137
      %p146 = scmp.eq.s32.totalorder %s21, 0
      %p147 = por %p145, %p146
      %p148 = scmp.ne.s32.totalorder %s136, %s137
      %p149 = scmp.eq.s32.totalorder %s22, 1
      %p150 = por %p148, %p149
      %p152 = scmp.ne.s32.totalorder %s137, %s151
      %p153 = scmp.eq.s32.totalorder %s22, 0
      %p154 = por %p152, %p153
      %s156 = sadd.s32 %s155, 1
      %p159 = scmp.eq.s32.totalorder %s16, 1
      %p160 = scmp.ne.s32.totalorder %s155, %s157
      %p161 = scmp.eq.s32.totalorder %s16, 0
      %p162 = por %p160, %p161
      %p163 = scmp.ne.s32.totalorder %s155, %s157
      %p164 = scmp.eq.s32.totalorder %s21, 1
      %p165 = por %p163, %p164
      %p166 = scmp.ne.s32.totalorder %s157, %s158
      %p167 = scmp.eq.s32.totalorder %s21, 0
      %p168 = por %p166, %p167
      %p169 = scmp.ne.s32.totalorder %s157, %s158
      %p170 = scmp.eq.s32.totalorder %s22, 1
      %p171 = por %p169, %p170
      %p173 = scmp.ne.s32.totalorder %s158, %s172
      %p174 = scmp.eq.s32.totalorder %s22, 0
      %p175 = por %p173, %p174
      %s176 = ssub.s32 %s16, %s23
      %p177 = scmp.eq.s32.totalorder %s176, 0
      %s179 = sadd.s32 %s178, 1
      %s180 = scalar_select %p177, %s178, %s179
      %p183 = pneg %p177
      %p184 = scmp.eq.s32.totalorder %s16, 1
      %p185 = por %p183, %p184
      %p186 = scmp.ne.s32.totalorder %s178, %s181
      %p187 = scmp.eq.s32.totalorder %s16, 0
      %p188 = por %p186, %p187
      %p189 = scmp.ne.s32.totalorder %s178, %s181
      %p190 = scmp.eq.s32.totalorder %s21, 1
      %p191 = por %p189, %p190
      %p192 = scmp.ne.s32.totalorder %s181, %s182
      %p193 = scmp.eq.s32.totalorder %s21, 0
      %p194 = por %p192, %p193
      %p195 = scmp.ne.s32.totalorder %s181, %s182
      %p196 = scmp.eq.s32.totalorder %s22, 1
      %p197 = por %p195, %p196
      %p199 = scmp.ne.s32.totalorder %s182, %s198
      %p200 = scmp.eq.s32.totalorder %s22, 0
      %p201 = por %p199, %p200
      %p202 = scmp.le.s32.totalorder 1, %s16
      %p203 = scmp.lt.s32.totalorder %s16, 3
      %p204 = pnand %p202, %p203
      %p205 = pneg %p204
      // Predicated region
      $region9: #{tpu_custom_call.1} parent=5 // pred_check
        _
      $region10: #{tpu_custom_call.1} parent=5 // pred_check_branch
        %207 = sbr.rel (%p204) target = $region12
      $region11: #{tpu_custom_call.1} parent=5 // pred_region
        %s208 = ssub.s32 %s16, 1
        // Predicated region
        $region13: #{tpu_custom_call.1} parent=11 // pred_check
          %p209 = pneg %p63
        $region14: #{tpu_custom_call.1} parent=11 // pred_check_branch
          %211 = sbr.rel (%p209) target = $region16
        $region15: #{tpu_custom_call.1} parent=11 // pred_region
          _
        $region16: #{tpu_custom_call.1} parent=11 // pred_fallthru
          _
        // Predicated region
        $region17: #{tpu_custom_call.1} parent=11 // pred_check
          %p212 = pneg %p84
        $region18: #{tpu_custom_call.1} parent=11 // pred_check_branch
          %214 = sbr.rel (%p212) target = $region20
        $region19: #{tpu_custom_call.1} parent=11 // pred_region
          _
        $region20: #{tpu_custom_call.1} parent=11 // pred_fallthru
          _
        // Predicated region
        $region21: #{tpu_custom_call.1} parent=11 // pred_check
          %p215 = pneg %p105
        $region22: #{tpu_custom_call.1} parent=11 // pred_check_branch
          %217 = sbr.rel (%p215) target = $region24
        $region23: #{tpu_custom_call.1} parent=11 // pred_region
          _
        $region24: #{tpu_custom_call.1} parent=11 // pred_fallthru
          _
        // Predicated region
        $region25: #{tpu_custom_call.1} parent=11 // pred_check
          %p218 = pneg %p126
        $region26: #{tpu_custom_call.1} parent=11 // pred_check_branch
          %220 = sbr.rel (%p218) target = $region28
        $region27: #{tpu_custom_call.1} parent=11 // pred_region
          _
        $region28: #{tpu_custom_call.1} parent=11 // pred_fallthru
          _
        // Predicated region
        $region29: #{tpu_custom_call.1} parent=11 // pred_check
          %p221 = pneg %p147
        $region30: #{tpu_custom_call.1} parent=11 // pred_check_branch
          %223 = sbr.rel (%p221) target = $region32
        $region31: #{tpu_custom_call.1} parent=11 // pred_region
          _
        $region32: #{tpu_custom_call.1} parent=11 // pred_fallthru
          _
        // Predicated region
        $region33: #{tpu_custom_call.1} parent=11 // pred_check
          %p224 = pneg %p168
        $region34: #{tpu_custom_call.1} parent=11 // pred_check_branch
          %226 = sbr.rel (%p224) target = $region36
        $region35: #{tpu_custom_call.1} parent=11 // pred_region
          _
        $region36: #{tpu_custom_call.1} parent=11 // pred_fallthru
          _
      $region12: #{tpu_custom_call.1} parent=5 // pred_fallthru
        _
      %p227 = scmp.lt.s32.totalorder %s16, 2
      // Predicated region
      $region37: #{tpu_custom_call.1} parent=5 // pred_check
        %p228 = pneg %p227
      $region38: #{tpu_custom_call.1} parent=5 // pred_check_branch
        %230 = sbr.rel (%p228) target = $region40
      $region39: #{tpu_custom_call.1} parent=5 // pred_region
        // Predicated region
        $region41: #{tpu_custom_call.1} parent=39 // pred_check
          %p231 = pneg %p36
        $region42: #{tpu_custom_call.1} parent=39 // pred_check_branch
          %233 = sbr.rel (%p231) target = $region44
        $region43: #{tpu_custom_call.1} parent=39 // pred_region
          %p234 = scmp.lt.s32.totalorder %s16, 1
          %s235 = scalar_select %p234, %s16, 1
          %s236 = smul.addr %s235, 8
          %s237 = scalar_lea.vmem %s0, %s236
        $region44: #{tpu_custom_call.1} parent=39 // pred_fallthru
          _
      $region40: #{tpu_custom_call.1} parent=5 // pred_fallthru
        _
      %p238 = scmp.le.s32.totalorder 1, %s16
      %p239 = scmp.lt.s32.totalorder %s16, 3
      %p240 = pnand %p238, %p239
      %p241 = pneg %p240
      // Predicated region
      $region45: #{tpu_custom_call.1} parent=5 // pred_check
        _
      $region46: #{tpu_custom_call.1} parent=5 // pred_check_branch
        %243 = sbr.rel (%p240) target = $region48
      $region47: #{tpu_custom_call.1} parent=5 // pred_region
        %s244 = ssub.s32 %s16, 1
        %p245 = scmp.lt.s32.totalorder %s21, 1
        %s246 = scalar_select %p245, %s21, 1
        %s247 = smul.addr %s246, 8
        %s248 = scalar_lea.vmem %s0, %s247
        %p249 = pneg %p42
        %p250 = pneg %p39
        %p251 = pneg %p63
        %p252 = pneg %p60
        %p253 = pneg %p84
        %p254 = pneg %p81
        %p255 = pneg %p105
        %p256 = pneg %p102
        %p257 = pneg %p126
        %p258 = pneg %p123
        %p259 = pneg %p147
        %p260 = pneg %p144
        %p261 = pneg %p168
        %p262 = pneg %p165
        %p263 = pneg %p194
        %p264 = pneg %p191
        %s265 = sand.u32 %s181, 1
        %s266 = scalar_lea.sflag [#allocation3], %s265
        %s267 = sand.u32 %s181, 1
        %s268 = smul.addr %s267, 8
        %s269 = scalar_lea.vmem [#allocation2], %s268
        %p270 = scmp.lt.s32.totalorder %s21, 1
        %s271 = scalar_select %p270, %s21, 1
        %s272 = smul.addr %s271, 8
        %s273 = scalar_lea.vmem %s0, %s272
        %v274 = vld [vmem:[%s273] sm:$0xff]
        %v275 = vld [vmem:[%s1] sm:$0xff]
        %v276 = vld [vmem:[%s1 + $0x8] sm:$0xff]
        %v277 = vld [vmem:[%s1 + $0x10] sm:$0xff]
        %v278 = vld [vmem:[%s1 + $0x18] sm:$0xff]
        %v279 = vld [vmem:[%s2] sm:$0x1]
        %v281 = vperm.slane %v279, 0
        %vm283 = vcmask 261120
        %v285 = vsel %vm283, %v274, 0
        %287 = vmatpush.msra.mxu0 0.0
        %288 = vmatpush.msra.mxu0 0.0
        %289 = vmatpush.msra.mxu0 0.0
        %290 = vmatpush.msra.mxu0 0.0
        %291 = vmatpush.msra.mxu0 0.0
        %292 = vmatpush.msra.mxu0 0.0
        %293 = vmatpush.msra.mxu0 0.0
        %294 = vmatpush.msra.mxu0 0.0
        %295 = vmatpush.msra.mxu0 0.0
        %296 = vmatpush.msra.mxu0 0.0
        %297 = vmatpush.msra.mxu0 0.0
        %298 = vmatpush.msra.mxu0 0.0
        %299 = vmatpush.msra.mxu0 %v278
        %300 = vmatpush.msra.mxu0 %v277
        %301 = vmatpush.msra.mxu0 %v276
        %302 = vmatpush.msra.mxu0 %v275
        %303 = vmatmul.f32.gmra.mxu0 %v285
        %v304 = vpop.f32.mrf.mxu0
        %v305 = vadd.f32 %v281, %v304
        %306 = vdwg.mxu0
        %vm307 = vcmask 523264
        %v308 = vsel %vm307, %v305, 0.0
        %v309 = vrot.slane %v308, 4
        %v310 = vadd.f32 %v308, %v309
        %v311 = vrot.slane %v310, 2
        %v312 = vadd.f32 %v310, %v311
        %v313 = vrot.slane %v312, 1
        %v314 = vadd.f32 %v312, %v313
        %v315 = vrcp.pop 8.0
        %v316 = vmul.f32 8.0, %v315
        %v317 = vsub.f32 1.0, %v316
        %v318 = vmul.f32 %v315, %v317
        %v319 = vadd.f32 %v315, %v318
        %vm320 = vweird.f32 %v315
        %v321 = vsel %vm320, %v315, %v319
        %v322 = vmul.f32 %v314, %v321
        %v323 = vsub.f32 %v305, %v322
        %v324 = vmul.f32 %v323, %v323
        %v325 = vsel %vm307, %v324, 0.0
        %v326 = vrot.slane %v325, 4
        %v327 = vadd.f32 %v325, %v326
        %v328 = vrot.slane %v327, 2
        %v329 = vadd.f32 %v327, %v328
        %v330 = vrot.slane %v329, 1
        %v331 = vadd.f32 %v329, %v330
        %v332 = vmul.f32 %v331, %v321
        %v333 = vadd.f32 %v332, 1e-05
        %v334 = vrsqrt.pop %v333
        %v335 = vmul.f32 %v334, %v333
        %v336 = vmul.f32 %v335, %v334
        %v337 = vmul.f32 0.5, %v336
        %v338 = vsub.f32 1.5, %v337
        %v339 = vmul.f32 %v334, %v338
        %vm340 = vweird.f32 %v333
        %vm341 = vweird.f32 %v334
        %vm342 = vmor %vm340, %vm341
        %v343 = vsel %vm342, %v334, %v339
        %v344 = vmul.f32 %v323, %v343
        %v345 = vld [vmem:[%s3] sm:$0xff]
        %v346 = vld [vmem:[%s3 + $0x8] sm:$0xff]
        %v347 = vld [vmem:[%s3 + $0x10] sm:$0xff]
        %v348 = vld [vmem:[%s3 + $0x18] sm:$0xff]
        %v349 = vld [vmem:[%s3 + $0x20] sm:$0xff]
        %v350 = vld [vmem:[%s3 + $0x28] sm:$0xff]
        %v351 = vld [vmem:[%s3 + $0x30] sm:$0xff]
        %v352 = vld [vmem:[%s3 + $0x38] sm:$0xff]
        %v353 = vld [vmem:[%s4] sm:$0x1]
        %v355 = vperm.slane %v353, 0
        %v358 = vsel %vm307, %v344, 0
        %360 = vmatpush.msra.mxu0 0.0
        %361 = vmatpush.msra.mxu0 0.0
        %362 = vmatpush.msra.mxu0 0.0
        %363 = vmatpush.msra.mxu0 0.0
        %364 = vmatpush.msra.mxu0 0.0
        %365 = vmatpush.msra.mxu0 0.0
        %366 = vmatpush.msra.mxu0 0.0
        %367 = vmatpush.msra.mxu0 0.0
        %368 = vmatpush.msra.mxu0 %v352
        %369 = vmatpush.msra.mxu0 %v351
        %370 = vmatpush.msra.mxu0 %v350
        %371 = vmatpush.msra.mxu0 %v349
        %372 = vmatpush.msra.mxu0 %v348
        %373 = vmatpush.msra.mxu0 %v347
        %374 = vmatpush.msra.mxu0 %v346
        %375 = vmatpush.msra.mxu0 %v345
        %376 = vmatmul.f32.gmra.mxu0 %v358
        %v377 = vpop.f32.mrf.mxu0
        %v378 = vadd.f32 %v355, %v377
        %379 = vdwg.mxu0
        %v380 = vmax.f32 %v378, 0.0
        %v381 = vld [vmem:[%s5] sm:$0xff]
        %v382 = vld [vmem:[%s6] sm:$0x1]
        %v384 = vperm.slane %v382, 0
        %vm386 = vcmask 64512
        %v388 = vsel %vm386, %v380, 0
        %390 = vmatpush.msra.mxu0 0.0
        %391 = vmatpush.msra.mxu0 0.0
        %392 = vmatpush.msra.mxu0 0.0
        %393 = vmatpush.msra.mxu0 0.0
        %394 = vmatpush.msra.mxu0 0.0
        %395 = vmatpush.msra.mxu0 0.0
        %396 = vmatpush.msra.mxu0 0.0
        %397 = vmatpush.msra.mxu0 0.0
        %398 = vmatpush.msra.mxu0 0.0
        %399 = vmatpush.msra.mxu0 0.0
        %400 = vmatpush.msra.mxu0 0.0
        %401 = vmatpush.msra.mxu0 0.0
        %402 = vmatpush.msra.mxu0 0.0
        %403 = vmatpush.msra.mxu0 0.0
        %404 = vmatpush.msra.mxu0 0.0
        %405 = vmatpush.msra.mxu0 %v381
        %406 = vmatmul.f32.gmra.mxu0 %v388
        %v407 = vpop.f32.mrf.mxu0
        %v408 = vadd.f32 %v384, %v407
        %409 = vdwg.mxu0
        %v410 = vmul.f32 %v408, 0.5
        %v411 = vtanh.pop %v410
        %v412 = vmul.f32 %v411, 0.5
        %v413 = vadd.f32 %v412, 0.5
        %v414 = vmul.f32 %v413, %v344
        %v415 = vmax.f32 %v414, 0.0
        %416 = vst.msk [vmem:[%s269] sm:$0xff] %vm307, %v415
        %s417 = sand.u32 %s181, 1
        %s418 = scalar_lea.sflag [#allocation3], %s417
        %s419 = sand.u32 %s181, 1
        %s420 = smul.addr %s419, 8
        %s421 = scalar_lea.vmem [#allocation2], %s420
        // Predicated region
        $region49: #{tpu_custom_call.1} parent=47 // pred_check
          %p422 = pneg %p191
        $region50: #{tpu_custom_call.1} parent=47 // pred_check_branch
          %424 = sbr.rel (%p422) target = $region52
        $region51: #{tpu_custom_call.1} parent=47 // pred_region
          %426 = vsyncadd %s418, 0
          %s427 = smul.addr %s21, 8
          %s428 = scalar_lea.hbm %s7, %s427
          %s430 = sshll.u32 %s421, 4
          %s431 = int_to_ptr.vmem [resolvable:$true] %s430
          %s432 = sshll.u32 %s428, 4
          %s433 = int_to_ptr.hbm [resolvable:$true] %s432
          %435 = dma.vmem_to_hbm [thread:$0]  %s431, 128, %s433, %s418
        $region52: #{tpu_custom_call.1} parent=47 // pred_fallthru
          _
      $region48: #{tpu_custom_call.1} parent=5 // pred_fallthru
        _
      %p436 = scmp.le.s32.totalorder 2, %s16
      // Predicated region
      $region53: #{tpu_custom_call.1} parent=5 // pred_check
        %p437 = pneg %p436
      $region54: #{tpu_custom_call.1} parent=5 // pred_check_branch
        %439 = sbr.rel (%p437) target = $region56
      $region55: #{tpu_custom_call.1} parent=5 // pred_region
        %s440 = ssub.s32 %s16, 2
        // Predicated region
        $region57: #{tpu_custom_call.1} parent=55 // pred_check
          %p441 = pneg %p197
        $region58: #{tpu_custom_call.1} parent=55 // pred_check_branch
          %443 = sbr.rel (%p441) target = $region60
        $region59: #{tpu_custom_call.1} parent=55 // pred_region
          %s444 = sand.u32 %s182, 1
          %s445 = scalar_lea.sflag [#allocation3], %s444
          %s446 = sand.u32 %s182, 1
          %s447 = smul.addr %s446, 8
          %s448 = scalar_lea.vmem [#allocation2], %s447
          %450 = dma.done %s445, 128
        $region60: #{tpu_custom_call.1} parent=55 // pred_fallthru
          _
      $region56: #{tpu_custom_call.1} parent=5 // pred_fallthru
        _
    $region6: #{tpu_custom_call.1} parent=1 // loop_footer
      %s20 = sadd.s32 1, %s16
    $region7: #{tpu_custom_call.1} parent=1 // loop_footer_branch
      %15 = sbr.rel target = $region3
    $region8: #{tpu_custom_call.1} parent=1 // loop_exit
      _
    %451 = vsyncpa [#allocation3], 1
    %s452 = scalar_lea.sflag [#allocation3], 1
    %453 = vsyncpa %s452, 1

</llo_original>
